<compile_context>
chip_gen: v7x
topology: tpu7x:2x2x1
jax: 0.10.0
libtpu: 0.0.40
codegen_flags: <defaults>
</compile_context>

<pallas_src>
import jax
import jax.numpy as jnp
import numpy as np
from jax.experimental import pallas as pl
from jax.experimental.pallas import tpu as pltpu


def _nf_kernel(bias_ref, z_ref, w_ref, s_ref, o_ref):
    # z_ref/o_ref: (TB, D) VMEM tiles; w_ref/s_ref: (1, D) VMEM; bias_ref: (1,) SMEM.
    z = z_ref[...]                                                   # (TB, D)
    # Per-row dot with the single weight row: VPU multiply + XLU lane reduce.
    t = jnp.sum(z * w_ref[...], axis=-1, keepdims=True) + bias_ref[0]   # (TB, 1)
    # tanh -> EUP; single (TB,1) x (1,D) broadcast inside the fused expression.
    o_ref[...] = z + s_ref[...] * jnp.tanh(t)


def _pick_tile_b(B, D):
    """Largest batch tile such that double-buffered input + output slabs stay
    well under a conservative VMEM budget (sized for v7x's smaller VMEM)."""
    vmem_budget = 16 * 1024 * 1024            # bytes, safe vs 32 MiB scoped default
    bytes_per_row = max(D, 128) * 4           # Mosaic pads lanes to 128 in VMEM
    cap = vmem_budget // (4 * bytes_per_row)  # 2x in + 2x out buffers
    cap = max(8, min((cap // 8) * 8, 1024))   # amortization saturates ~512-1024 rows
    if B <= cap:
        return B                              # single whole-array block
    return cap


def normalizing_flow(z, weight, scale, bias, *, tile_b=None):
    """z: (B, D) f32; weight, scale: (1, D) f32; bias: scalar f32."""
    B, D = z.shape
    if tile_b is None:
        tile_b = _pick_tile_b(B, D)
    tile_b = int(tile_b)
    if tile_b != B:
        # When actually tiling, the sublane dim of a block must be a multiple of 8.
        tile_b = max(8, (tile_b // 8) * 8)
    grid = (pl.cdiv(B, tile_b),)              # ragged final block handled by Pallas

    bias_arr = jnp.asarray(bias, dtype=z.dtype).reshape((1,))

    return pl.pallas_call(
        _nf_kernel,
        out_shape=jax.ShapeDtypeStruct((B, D), z.dtype),
        grid_spec=pltpu.PrefetchScalarGridSpec(
            num_scalar_prefetch=0,
            grid=grid,
            in_specs=[
                pl.BlockSpec(memory_space=pltpu.SMEM),          # bias scalar
                pl.BlockSpec((tile_b, D), lambda i: (i, 0)),    # z tile
                pl.BlockSpec((1, D), lambda i: (0, 0)),         # weight (fetched once)
                pl.BlockSpec((1, D), lambda i: (0, 0)),         # scale  (fetched once)
            ],
            out_specs=pl.BlockSpec((tile_b, D), lambda i: (i, 0)),
        ),
        compiler_params=pltpu.CompilerParams(
            dimension_semantics=("parallel",),
            vmem_limit_bytes=32 * 1024 * 1024,
        ),
    )(bias_arr, z, weight, scale)


def normalizing_flow_ref(z, weight, scale, bias):
    t = z @ weight.T + bias                   # (B, 1)
    return z + scale * jnp.tanh(t)


if __name__ == "__main__":
    key = jax.random.PRNGKey(0)
    k1, k2 = jax.random.split(key)

    # Small shape consistent with the module: batch=6, z_dim=32.
    # Parameters match nn.Module.__init__: bias=1.0, weight=ones, scale=ones.
    B, D = 6, 32
    z = jax.random.normal(k1, (B, D), dtype=jnp.float32)
    weight = jnp.ones((1, D), dtype=jnp.float32)
    scale = jnp.ones((1, D), dtype=jnp.float32)
    bias = jnp.float32(1.0)

    out = jax.block_until_ready(normalizing_flow(z, weight, scale, bias))
    ref = normalizing_flow_ref(z, weight, scale, bias)
    np.testing.assert_allclose(np.asarray(out), np.asarray(ref),
                               rtol=1e-5, atol=1e-5)

    # Multi-tile path: forced small tile so the grid has several steps, with a
    # ragged final block (160 % 64 != 0), non-128 feature dim, and non-trivial
    # weight/scale/bias.
    B2, D2 = 160, 96
    z2 = jax.random.normal(k2, (B2, D2), dtype=jnp.float32)
    w2 = jax.random.normal(jax.random.PRNGKey(1), (1, D2), dtype=jnp.float32)
    s2 = jax.random.normal(jax.random.PRNGKey(2), (1, D2), dtype=jnp.float32)
    b2 = jnp.float32(0.5)
    out2 = jax.block_until_ready(normalizing_flow(z2, w2, s2, b2, tile_b=64))
    ref2 = normalizing_flow_ref(z2, w2, s2, b2)
    np.testing.assert_allclose(np.asarray(out2), np.asarray(ref2),
                               rtol=1e-5, atol=1e-5)

    print("KERNEL_OK")
</pallas_src>

<mosaic_0001>
module attributes {stable_mosaic.version = 11 : i64} {
  func.func @_nf_kernel(%arg0: i32, %arg1: memref<1xf32, #tpu.memory_space<smem>>, %arg2: memref<6x32xf32, #tpu.memory_space<vmem>>, %arg3: memref<1x32xf32, #tpu.memory_space<vmem>>, %arg4: memref<1x32xf32, #tpu.memory_space<vmem>>, %arg5: memref<6x32xf32, #tpu.memory_space<vmem>>) attributes {dimension_semantics = [#tpu.dimension_semantics<parallel>], iteration_bounds = array<i64: 1>, scalar_prefetch = 0 : i64, scratch_operands = 0 : i64, tpu.core_type = #tpu.core_type<tc>, window_params = [{transform_indices = @transform_0, window_bounds = array<i64: 1>}, {transform_indices = @transform_1, window_bounds = array<i64: 6, 32>}, {pipeline_mode = #tpu.pipeline_mode<synchronous>, transform_indices = @transform_2, window_bounds = array<i64: 1, 32>}, {pipeline_mode = #tpu.pipeline_mode<synchronous>, transform_indices = @transform_3, window_bounds = array<i64: 1, 32>}, {transform_indices = @transform_4, window_bounds = array<i64: 6, 32>}]} {
    %c0 = arith.constant 0 : index
    %c0_0 = arith.constant 0 : index
    %0 = vector.load %arg2[%c0, %c0_0] : memref<6x32xf32, #tpu.memory_space<vmem>>, vector<6x32xf32>
    %c0_1 = arith.constant 0 : index
    %c0_2 = arith.constant 0 : index
    %1 = vector.load %arg3[%c0_1, %c0_2] : memref<1x32xf32, #tpu.memory_space<vmem>>, vector<1x32xf32>
    %2 = vector.broadcast %1 : vector<1x32xf32> to vector<6x32xf32>
    %3 = arith.mulf %0, %2 : vector<6x32xf32>
    %cst = arith.constant dense<0.000000e+00> : vector<6xf32>
    %4 = vector.multi_reduction <add>, %3, %cst [1] : vector<6x32xf32> to vector<6xf32>
    %5 = vector.shape_cast %4 : vector<6xf32> to vector<6x1xf32>
    %c0_3 = arith.constant 0 : index
    %6 = memref.load %arg1[%c0_3] : memref<1xf32, #tpu.memory_space<smem>>
    %7 = vector.broadcast %6 : f32 to vector<6x1xf32>
    %8 = arith.addf %5, %7 : vector<6x1xf32>
    %c0_4 = arith.constant 0 : index
    %c0_5 = arith.constant 0 : index
    %9 = vector.load %arg4[%c0_4, %c0_5] : memref<1x32xf32, #tpu.memory_space<vmem>>, vector<1x32xf32>
    %10 = math.tanh %8 : vector<6x1xf32>
    %11 = vector.broadcast %9 : vector<1x32xf32> to vector<6x32xf32>
    %12 = vector.broadcast %10 : vector<6x1xf32> to vector<6x32xf32>
    %13 = arith.mulf %11, %12 : vector<6x32xf32>
    %14 = arith.addf %0, %13 : vector<6x32xf32>
    %c0_6 = arith.constant 0 : index
    %c0_7 = arith.constant 0 : index
    %15 = vector.load %arg5[%c0_6, %c0_7] : memref<6x32xf32, #tpu.memory_space<vmem>>, vector<6x32xf32>
    tpu.vector_store %arg5[%c0_6, %c0_7], %14 {strides = array<i32>} : memref<6x32xf32, #tpu.memory_space<vmem>>, vector<6x32xf32>,
    return
  }
  func.func @transform_0(%arg0: i32) -> i32 {
    %c0_i32 = arith.constant 0 : i32
    %c0_i32_0 = arith.constant 0 : i32
    return %c0_i32 : i32
  }
  func.func @transform_1(%arg0: i32) -> (i32, i32) {
    %c0_i32 = arith.constant 0 : i32
    %c0_i32_0 = arith.constant 0 : i32
    return %arg0, %c0_i32 : i32, i32
  }
  func.func @transform_2(%arg0: i32) -> (i32, i32) {
    %c0_i32 = arith.constant 0 : i32
    %c0_i32_0 = arith.constant 0 : i32
    %c0_i32_1 = arith.constant 0 : i32
    return %c0_i32, %c0_i32_0 : i32, i32
  }
  func.func @transform_3(%arg0: i32) -> (i32, i32) {
    %c0_i32 = arith.constant 0 : i32
    %c0_i32_0 = arith.constant 0 : i32
    %c0_i32_1 = arith.constant 0 : i32
    return %c0_i32, %c0_i32_0 : i32, i32
  }
  func.func @transform_4(%arg0: i32) -> (i32, i32) {
    %c0_i32 = arith.constant 0 : i32
    %c0_i32_0 = arith.constant 0 : i32
    return %arg0, %c0_i32 : i32, i32
  }
}

</mosaic_0001>

<llo_original>
// kernel: tpu_custom_call.1
$region0: #{tpu_custom_call.1}
  #allocation0 [shape = 'u32[]', space=smem, size = 0x4, offset = 0x4, fixed_abs, tag = 'smem constant byte address 0x4 - core index']
  #allocation1 [shape = 'u32[144,128]{1,0:T(1,128)}', space=vmem, size = 0x12000, scoped, tag = 'internal scratch']
  #allocation2 [shape = 'f32[1]{0:T(128)S(6)}', space=smem, size = 0x200, scoped, tag = 'scoped memory for tpu_custom_call.1']
  %s0 = inlined_call_operand.<no memory space> [shape: f32[1], index: 0, kind: input, shape index: {}]
  %s1 = inlined_call_operand.hbm [shape: f32[6,32], index: 1, kind: input, shape index: {}]
  %s2 = inlined_call_operand.vmem [shape: f32[1,32], index: 2, kind: input, shape index: {}]
  %s3 = inlined_call_operand.vmem [shape: f32[1,32], index: 3, kind: input, shape index: {}]
  %s4 = inlined_call_operand.hbm [shape: f32[6,32], index: 4, kind: output, shape index: {}]
  %s5 = sld [smem:[#allocation0]]
  $region30: #{tpu_custom_call.1} parent=0
    _
  %s7 = ssub.s32 1, %s5
  %s8 = scalar_select 0, %s7, %s5
  %9 = sst [smem:[#allocation2]] %s0
  $region1: #{tpu_custom_call.1} parent=0
    #allocation3 [shape = 'u8[4096]{0}', space=vmem, size = 0x1000, scoped, tag = 'input window, operand 1, single buffered']
    #allocation4 [shape = 's32[1]{0}', space=sflag, size = 0x4, scoped, tag = 'scoped memory for tpu_custom_call.1']
    #allocation5 [shape = 's32[1]{0}', space=sflag, size = 0x4, scoped, tag = 'scoped memory for tpu_custom_call.1']
    #allocation6 [shape = 'u8[4096]{0}', space=vmem, size = 0x1000, scoped, tag = 'output window, operand 0, single buffered']
    %10 = vsyncpa [#allocation4], 0
    %11 = vsyncpa [#allocation5], 0
    // Predicated region
    $region2: #{tpu_custom_call.1} parent=1 // pred_check
      _
    $region3: #{tpu_custom_call.1} parent=1 // pred_check_branch
      %13 = sbr.rel (0) target = $region5
    $region4: #{tpu_custom_call.1} parent=1 // pred_region
      _
    $region5: #{tpu_custom_call.1} parent=1 // pred_fallthru
      _
    // Predicated region
    $region6: #{tpu_custom_call.1} parent=1 // pred_check
      _
    $region7: #{tpu_custom_call.1} parent=1 // pred_check_branch
      %15 = sbr.rel (0) target = $region9
    $region8: #{tpu_custom_call.1} parent=1 // pred_region
      %s17 = ssub.s32 128, 128
      %18 = vsyncadd [#allocation4], %s17
      %s20 = sshll.u32 [#allocation3], 4
      %s21 = int_to_ptr.vmem [resolvable:$true] %s20
      %23 = dma.hbm_to_vmem [thread:$0]  %s1, 128, %s21, [#allocation4]
    $region9: #{tpu_custom_call.1} parent=1 // pred_fallthru
      _
    // Predicated region
    $region10: #{tpu_custom_call.1} parent=1 // pred_check
      _
    $region11: #{tpu_custom_call.1} parent=1 // pred_check_branch
      %25 = sbr.rel (0) target = $region13
    $region12: #{tpu_custom_call.1} parent=1 // pred_region
      _
    $region13: #{tpu_custom_call.1} parent=1 // pred_fallthru
      _
    // Predicated region
    $region14: #{tpu_custom_call.1} parent=1 // pred_check
      _
    $region15: #{tpu_custom_call.1} parent=1 // pred_check_branch
      %27 = sbr.rel (0) target = $region17
    $region16: #{tpu_custom_call.1} parent=1 // pred_region
      _
    $region17: #{tpu_custom_call.1} parent=1 // pred_fallthru
      _
    // Predicated region
    $region18: #{tpu_custom_call.1} parent=1 // pred_check
      _
    $region19: #{tpu_custom_call.1} parent=1 // pred_check_branch
      %29 = sbr.rel (0) target = $region21
    $region20: #{tpu_custom_call.1} parent=1 // pred_region
      %30 = dma.done [#allocation4], 128
    $region21: #{tpu_custom_call.1} parent=1 // pred_fallthru
      _
    %v31 = vld [vmem:[#allocation3] sm:$0x3f]
    %v32 = vld [vmem:[%s2] sm:$0x1]
    %v34 = vlaneseq
    %v35 = vshrl.u32 %v34, 7
    %v36 = vsub.s32 0, %v35
    %v37 = vrot.slane %v32, %v36
    %v39 = vmul.f32 %v31, %v37
    %vm40 = vcmask 259072
    %v41 = vsel %vm40, %v39, 0.0
    %42 = vadd.xlane.f32.xlu0 %v41
    %v43 = vpop.xlane.xlu0 %42
    %s44 = sld [smem:[#allocation2]]
    %v45 = vstv %s44
    %v46 = vadd.f32 %v43, %v45
    %v47 = vld [vmem:[%s3] sm:$0x1]
    %v48 = vtanh.pop %v46
    %v50 = vlaneseq
    %v51 = vshrl.u32 %v50, 7
    %v52 = vsub.s32 0, %v51
    %v53 = vrot.slane %v47, %v52
    %v55 = vmul.f32 %v53, %v48
    %v56 = vadd.f32 %v31, %v55
    %57 = vst.msk [vmem:[#allocation6] sm:$0x3f] %vm40, %v56
    // Predicated region
    $region22: #{tpu_custom_call.1} parent=1 // pred_check
      _
    $region23: #{tpu_custom_call.1} parent=1 // pred_check_branch
      %59 = sbr.rel (0) target = $region25
    $region24: #{tpu_custom_call.1} parent=1 // pred_region
      %s61 = ssub.s32 128, 128
      %62 = vsyncadd [#allocation5], %s61
      %s64 = sshll.u32 [#allocation6], 4
      %s65 = int_to_ptr.vmem [resolvable:$true] %s64
      %67 = dma.vmem_to_hbm [thread:$0]  %s65, 128, %s4, [#allocation5]
    $region25: #{tpu_custom_call.1} parent=1 // pred_fallthru
      _
    // Predicated region
    $region26: #{tpu_custom_call.1} parent=1 // pred_check
      _
    $region27: #{tpu_custom_call.1} parent=1 // pred_check_branch
      %69 = sbr.rel (0) target = $region29
    $region28: #{tpu_custom_call.1} parent=1 // pred_region
      %70 = dma.done [#allocation5], 128
    $region29: #{tpu_custom_call.1} parent=1 // pred_fallthru
      _
    %71 = vsyncpa [#allocation4], 1
    %72 = vsyncpa [#allocation5], 1

</llo_original>
